<compile_context>
chip_gen: v6e
topology: v6e:2x2x1
jax: 0.10.0
libtpu: 0.0.40
codegen_flags: <defaults>
</compile_context>

<pallas_src>
import math

import jax
import jax.numpy as jnp
from jax.experimental import pallas as pl
from jax.experimental.pallas import tpu as pltpu

_INV_SQRT2 = 1.0 / math.sqrt(2.0)
_ROW_CHUNK = 8  # image rows processed per inner chunk (sublane-aligned)


def _gelu_exact(x):
    # PyTorch nn.GELU() default = exact erf-based GELU (keep math in f32).
    return 0.5 * x * (1.0 + jax.lax.erf(x * _INV_SQRT2))


# -----------------------------------------------------------------------------
# Fused kernel: one batch element per grid step.
#   x_ref  : (1, H*W, dim)        o_ref : (1, H*W, dim)
#   w1_ref : (dim, hidden)        b1_ref: (1, hidden)
#   wdw_ref: (3, 3, hidden)       bdw_ref: (1, hidden)
#   w2_ref : (hidden, dim)        b2_ref: (1, dim)
#   pbuf   : VMEM (H+2, W+2, hidden) f32 scratch (zero-padded image, NHWC-ish)
# -----------------------------------------------------------------------------
def leff_fused_kernel(x_ref, w1_ref, b1_ref, wdw_ref, bdw_ref, w2_ref, b2_ref,
                      o_ref, pbuf):
    hh = pbuf.shape[0] - 2          # spatial H (== W)
    hidden = pbuf.shape[2]

    # Zero the padded scratch.  Only the 1-wide border must be zero, but a full
    # fill is cheap, always correct, and is redone every grid step so megacore
    # "parallel" splitting of the batch grid stays safe (scratch is per-core).
    pbuf[...] = jnp.zeros_like(pbuf)

    # --- stage 1: linear1 + GELU, streamed in row chunks into padded scratch
    for r0 in range(0, hh, _ROW_CHUNK):
        rows = min(_ROW_CHUNK, hh - r0)
        ts = r0 * hh                               # first token of this chunk
        xin = x_ref[0, ts:ts + rows * hh, :]
        h1 = jnp.dot(xin.astype(w1_ref.dtype), w1_ref[...],
                     preferred_element_type=jnp.float32)
        h1 = _gelu_exact(h1 + b1_ref[...])
        pbuf[1 + r0:1 + r0 + rows, 1:1 + hh, :] = h1.reshape(rows, hh, hidden)

    # --- stages 2+3: depthwise 3x3 conv + GELU, then linear2, per row chunk
    wdw = wdw_ref[...]                             # (3, 3, hidden)
    bdw = bdw_ref[...]                             # (1, hidden)
    for r0 in range(0, hh, _ROW_CHUNK):
        rows = min(_ROW_CHUNK, hh - r0)
        acc = jnp.zeros((rows, hh, hidden), jnp.float32)
        for ky in range(3):
            for kx in range(3):
                patch = pbuf[r0 + ky:r0 + ky + rows, kx:kx + hh, :]
                acc = acc + patch * wdw[ky, kx]
        h = _gelu_exact(acc + bdw)                 # (rows, hh, hidden) f32
        h2 = h.reshape(rows * hh, hidden)
        y = jnp.dot(h2.astype(w2_ref.dtype), w2_ref[...],
                    preferred_element_type=jnp.float32)
        y = y + b2_ref[...]
        o_ref[0, r0 * hh:(r0 + rows) * hh, :] = y.astype(o_ref.dtype)


# -----------------------------------------------------------------------------
# Wrapper
# -----------------------------------------------------------------------------
def leff_forward(x, params):
    """x: (bs, hw, dim) -> (bs, hw, dim).  Matches LeFF.forward (defaults)."""
    bs, hw, c = x.shape
    hh = int(math.isqrt(hw))
    assert hh * hh == hw, "sequence length must be a perfect square"

    w1, b1 = params["w1"], params["b1"]          # (dim, hidden), (1, hidden)
    wdw, bdw = params["wdw"], params["bdw"]      # (3, 3, hidden), (1, hidden)
    w2, b2 = params["w2"], params["b2"]          # (hidden, dim), (1, dim)
    hidden = w1.shape[1]

    return pl.pallas_call(
        leff_fused_kernel,
        out_shape=jax.ShapeDtypeStruct((bs, hw, c), x.dtype),
        grid=(bs,),
        in_specs=[
            pl.BlockSpec((1, hw, c), lambda b: (b, 0, 0)),      # x (per-batch)
            pl.BlockSpec((c, hidden), lambda b: (0, 0)),        # w1 (resident)
            pl.BlockSpec((1, hidden), lambda b: (0, 0)),        # b1
            pl.BlockSpec((3, 3, hidden), lambda b: (0, 0, 0)),  # wdw
            pl.BlockSpec((1, hidden), lambda b: (0, 0)),        # bdw
            pl.BlockSpec((hidden, c), lambda b: (0, 0)),        # w2
            pl.BlockSpec((1, c), lambda b: (0, 0)),             # b2
        ],
        out_specs=pl.BlockSpec((1, hw, c), lambda b: (b, 0, 0)),
        scratch_shapes=[pltpu.VMEM((hh + 2, hh + 2, hidden), jnp.float32)],
        compiler_params=pltpu.CompilerParams(
            dimension_semantics=("parallel",),          # shard batch over TCs
            vmem_limit_bytes=48 * 1024 * 1024),         # fits v7x 64MiB VMEM
    )(x, w1, b1, wdw, bdw, w2, b2)


def init_params(key, dim, hidden_dim, dtype=jnp.float32):
    """Same init distribution as the PyTorch module; weights stored (in, out)
    for right-multiplication, depthwise conv weight as (kh, kw, channels).
    Pass dtype=jnp.bfloat16 for the bf16-MXU fast path on v6e/v7x."""
    k1, k2, k3, k4, k5, k6 = jax.random.split(key, 6)
    s1 = 1.0 / math.sqrt(dim)
    s2 = 1.0 / math.sqrt(hidden_dim)
    sdw = 1.0 / 3.0  # fan_in = 1*3*3 for depthwise conv
    return {
        "w1": jax.random.uniform(k1, (dim, hidden_dim), jnp.float32, -s1, s1).astype(dtype),
        "b1": jax.random.uniform(k2, (1, hidden_dim), jnp.float32, -s1, s1),
        "wdw": jax.random.uniform(k3, (3, 3, hidden_dim), jnp.float32, -sdw, sdw),
        "bdw": jax.random.uniform(k4, (1, hidden_dim), jnp.float32, -sdw, sdw),
        "w2": jax.random.uniform(k5, (hidden_dim, dim), jnp.float32, -s2, s2).astype(dtype),
        "b2": jax.random.uniform(k6, (1, dim), jnp.float32, -s2, s2),
    }


if __name__ == "__main__":
    dim = 32
    hidden_dim = 128
    bs = 2
    hh = 8
    hw = hh * hh  # 64 tokens -> 8x8 spatial grid

    key = jax.random.PRNGKey(0)
    kx, kp = jax.random.split(key)
    x = jax.random.normal(kx, (bs, hw, dim), jnp.float32)
    params = init_params(kp, dim, hidden_dim)  # f32 -> exact PyTorch numerics

    out = jax.jit(leff_forward)(x, params)
    out = jax.block_until_ready(out)
    assert out.shape == (bs, hw, dim) and out.dtype == jnp.float32
    assert bool(jnp.all(jnp.isfinite(out)))
    print("KERNEL_OK")
</pallas_src>

<mosaic_0001>
module attributes {stable_mosaic.version = 11 : i64} {
  func.func @leff_fused_kernel(%arg0: i32, %arg1: memref<1x64x32xf32, #tpu.memory_space<vmem>>, %arg2: memref<32x128xf32, #tpu.memory_space<vmem>>, %arg3: memref<1x128xf32, #tpu.memory_space<vmem>>, %arg4: memref<3x3x128xf32, #tpu.memory_space<vmem>>, %arg5: memref<1x128xf32, #tpu.memory_space<vmem>>, %arg6: memref<128x32xf32, #tpu.memory_space<vmem>>, %arg7: memref<1x32xf32, #tpu.memory_space<vmem>>, %arg8: memref<1x64x32xf32, #tpu.memory_space<vmem>>, %arg9: memref<10x10x128xf32, #tpu.memory_space<vmem>>) attributes {dimension_semantics = [#tpu.dimension_semantics<parallel>], iteration_bounds = array<i64: 2>, scalar_prefetch = 0 : i64, scratch_operands = 1 : i64, tpu.core_type = #tpu.core_type<tc>, window_params = [{transform_indices = @transform_0, window_bounds = array<i64: 1, 64, 32>}, {pipeline_mode = #tpu.pipeline_mode<synchronous>, transform_indices = @transform_1, window_bounds = array<i64: 32, 128>}, {pipeline_mode = #tpu.pipeline_mode<synchronous>, transform_indices = @transform_2, window_bounds = array<i64: 1, 128>}, {pipeline_mode = #tpu.pipeline_mode<synchronous>, transform_indices = @transform_3, window_bounds = array<i64: 3, 3, 128>}, {pipeline_mode = #tpu.pipeline_mode<synchronous>, transform_indices = @transform_4, window_bounds = array<i64: 1, 128>}, {pipeline_mode = #tpu.pipeline_mode<synchronous>, transform_indices = @transform_5, window_bounds = array<i64: 128, 32>}, {pipeline_mode = #tpu.pipeline_mode<synchronous>, transform_indices = @transform_6, window_bounds = array<i64: 1, 32>}, {transform_indices = @transform_7, window_bounds = array<i64: 1, 64, 32>}]} {
    %cst = arith.constant 0.000000e+00 : f32
    %0 = vector.broadcast %cst : f32 to vector<10x10x128xf32>
    %c0 = arith.constant 0 : index
    %c0_0 = arith.constant 0 : index
    %c0_1 = arith.constant 0 : index
    %1 = vector.load %arg9[%c0, %c0_0, %c0_1] : memref<10x10x128xf32, #tpu.memory_space<vmem>>, vector<10x10x128xf32>
    tpu.vector_store %arg9[%c0, %c0_0, %c0_1], %0 {strides = array<i32>} : memref<10x10x128xf32, #tpu.memory_space<vmem>>, vector<10x10x128xf32>,
    %c0_2 = arith.constant 0 : index
    %c0_3 = arith.constant 0 : index
    %c0_4 = arith.constant 0 : index
    %2 = vector.load %arg1[%c0_2, %c0_3, %c0_4] : memref<1x64x32xf32, #tpu.memory_space<vmem>>, vector<1x64x32xf32>
    %3 = vector.shape_cast %2 : vector<1x64x32xf32> to vector<64x32xf32>
    %c0_5 = arith.constant 0 : index
    %c0_6 = arith.constant 0 : index
    %4 = vector.load %arg2[%c0_5, %c0_6] : memref<32x128xf32, #tpu.memory_space<vmem>>, vector<32x128xf32>
    %cst_7 = arith.constant dense<0.000000e+00> : vector<64x128xf32>
    %5 = tpu.matmul %3, %4, %cst_7 {dimension_numbers = #tpu.dot_dimension_numbers<[1], [0], [0], [1], [0, 0, 1, 1], [], []>} : vector<64x32xf32>, vector<32x128xf32>, vector<64x128xf32> -> vector<64x128xf32>
    %c0_8 = arith.constant 0 : index
    %c0_9 = arith.constant 0 : index
    %6 = vector.load %arg3[%c0_8, %c0_9] : memref<1x128xf32, #tpu.memory_space<vmem>>, vector<1x128xf32>
    %7 = vector.broadcast %6 : vector<1x128xf32> to vector<64x128xf32>
    %8 = arith.addf %5, %7 : vector<64x128xf32>
    %cst_10 = arith.constant 5.000000e-01 : f32
    %9 = vector.broadcast %cst_10 : f32 to vector<64x128xf32>
    %10 = arith.mulf %9, %8 : vector<64x128xf32>
    %cst_11 = arith.constant 0.707106769 : f32
    %11 = vector.broadcast %cst_11 : f32 to vector<64x128xf32>
    %12 = arith.mulf %8, %11 : vector<64x128xf32>
    %13 = math.erf %12 : vector<64x128xf32>
    %cst_12 = arith.constant 1.000000e+00 : f32
    %14 = vector.broadcast %cst_12 : f32 to vector<64x128xf32>
    %15 = arith.addf %14, %13 : vector<64x128xf32>
    %16 = arith.mulf %10, %15 : vector<64x128xf32>
    %17 = vector.shape_cast %16 : vector<64x128xf32> to vector<8x8x128xf32>
    %c1 = arith.constant 1 : index
    %c1_13 = arith.constant 1 : index
    %c0_14 = arith.constant 0 : index
    %18 = vector.load %arg9[%c1, %c1_13, %c0_14] : memref<10x10x128xf32, #tpu.memory_space<vmem>>, vector<8x8x128xf32>
    tpu.vector_store %arg9[%c1, %c1_13, %c0_14], %17 {strides = array<i32>} : memref<10x10x128xf32, #tpu.memory_space<vmem>>, vector<8x8x128xf32>,
    %c0_15 = arith.constant 0 : index
    %c0_16 = arith.constant 0 : index
    %c0_17 = arith.constant 0 : index
    %19 = vector.load %arg4[%c0_15, %c0_16, %c0_17] : memref<3x3x128xf32, #tpu.memory_space<vmem>>, vector<3x3x128xf32>
    %c0_18 = arith.constant 0 : index
    %c0_19 = arith.constant 0 : index
    %20 = vector.load %arg5[%c0_18, %c0_19] : memref<1x128xf32, #tpu.memory_space<vmem>>, vector<1x128xf32>
    %cst_20 = arith.constant 0.000000e+00 : f32
    %21 = vector.broadcast %cst_20 : f32 to vector<8x8x128xf32>
    %c0_21 = arith.constant 0 : index
    %c0_22 = arith.constant 0 : index
    %c0_23 = arith.constant 0 : index
    %22 = vector.load %arg9[%c0_21, %c0_22, %c0_23] : memref<10x10x128xf32, #tpu.memory_space<vmem>>, vector<8x8x128xf32>
    %23 = vector.extract_strided_slice %19 {offsets = [0, 0, 0], sizes = [1, 1, 128], strides = [1, 1, 1]} : vector<3x3x128xf32> to vector<1x1x128xf32>
    %24 = vector.shape_cast %23 : vector<1x1x128xf32> to vector<128xf32>
    %25 = vector.shape_cast %24 : vector<128xf32> to vector<1x1x128xf32>
    %26 = vector.broadcast %25 : vector<1x1x128xf32> to vector<8x8x128xf32>
    %27 = arith.mulf %22, %26 : vector<8x8x128xf32>
    %28 = arith.addf %21, %27 : vector<8x8x128xf32>
    %c0_24 = arith.constant 0 : index
    %c1_25 = arith.constant 1 : index
    %c0_26 = arith.constant 0 : index
    %29 = vector.load %arg9[%c0_24, %c1_25, %c0_26] : memref<10x10x128xf32, #tpu.memory_space<vmem>>, vector<8x8x128xf32>
    %30 = vector.extract_strided_slice %19 {offsets = [0, 1, 0], sizes = [1, 1, 128], strides = [1, 1, 1]} : vector<3x3x128xf32> to vector<1x1x128xf32>
    %31 = vector.shape_cast %30 : vector<1x1x128xf32> to vector<128xf32>
    %32 = vector.shape_cast %31 : vector<128xf32> to vector<1x1x128xf32>
    %33 = vector.broadcast %32 : vector<1x1x128xf32> to vector<8x8x128xf32>
    %34 = arith.mulf %29, %33 : vector<8x8x128xf32>
    %35 = arith.addf %28, %34 : vector<8x8x128xf32>
    %c0_27 = arith.constant 0 : index
    %c2 = arith.constant 2 : index
    %c0_28 = arith.constant 0 : index
    %36 = vector.load %arg9[%c0_27, %c2, %c0_28] : memref<10x10x128xf32, #tpu.memory_space<vmem>>, vector<8x8x128xf32>
    %37 = vector.extract_strided_slice %19 {offsets = [0, 2, 0], sizes = [1, 1, 128], strides = [1, 1, 1]} : vector<3x3x128xf32> to vector<1x1x128xf32>
    %38 = vector.shape_cast %37 : vector<1x1x128xf32> to vector<128xf32>
    %39 = vector.shape_cast %38 : vector<128xf32> to vector<1x1x128xf32>
    %40 = vector.broadcast %39 : vector<1x1x128xf32> to vector<8x8x128xf32>
    %41 = arith.mulf %36, %40 : vector<8x8x128xf32>
    %42 = arith.addf %35, %41 : vector<8x8x128xf32>
    %c1_29 = arith.constant 1 : index
    %c0_30 = arith.constant 0 : index
    %c0_31 = arith.constant 0 : index
    %43 = vector.load %arg9[%c1_29, %c0_30, %c0_31] : memref<10x10x128xf32, #tpu.memory_space<vmem>>, vector<8x8x128xf32>
    %44 = vector.extract_strided_slice %19 {offsets = [1, 0, 0], sizes = [1, 1, 128], strides = [1, 1, 1]} : vector<3x3x128xf32> to vector<1x1x128xf32>
    %45 = vector.shape_cast %44 : vector<1x1x128xf32> to vector<128xf32>
    %46 = vector.shape_cast %45 : vector<128xf32> to vector<1x1x128xf32>
    %47 = vector.broadcast %46 : vector<1x1x128xf32> to vector<8x8x128xf32>
    %48 = arith.mulf %43, %47 : vector<8x8x128xf32>
    %49 = arith.addf %42, %48 : vector<8x8x128xf32>
    %c1_32 = arith.constant 1 : index
    %c1_33 = arith.constant 1 : index
    %c0_34 = arith.constant 0 : index
    %50 = vector.load %arg9[%c1_32, %c1_33, %c0_34] : memref<10x10x128xf32, #tpu.memory_space<vmem>>, vector<8x8x128xf32>
    %51 = vector.extract_strided_slice %19 {offsets = [1, 1, 0], sizes = [1, 1, 128], strides = [1, 1, 1]} : vector<3x3x128xf32> to vector<1x1x128xf32>
    %52 = vector.shape_cast %51 : vector<1x1x128xf32> to vector<128xf32>
    %53 = vector.shape_cast %52 : vector<128xf32> to vector<1x1x128xf32>
    %54 = vector.broadcast %53 : vector<1x1x128xf32> to vector<8x8x128xf32>
    %55 = arith.mulf %50, %54 : vector<8x8x128xf32>
    %56 = arith.addf %49, %55 : vector<8x8x128xf32>
    %c1_35 = arith.constant 1 : index
    %c2_36 = arith.constant 2 : index
    %c0_37 = arith.constant 0 : index
    %57 = vector.load %arg9[%c1_35, %c2_36, %c0_37] : memref<10x10x128xf32, #tpu.memory_space<vmem>>, vector<8x8x128xf32>
    %58 = vector.extract_strided_slice %19 {offsets = [1, 2, 0], sizes = [1, 1, 128], strides = [1, 1, 1]} : vector<3x3x128xf32> to vector<1x1x128xf32>
    %59 = vector.shape_cast %58 : vector<1x1x128xf32> to vector<128xf32>
    %60 = vector.shape_cast %59 : vector<128xf32> to vector<1x1x128xf32>
    %61 = vector.broadcast %60 : vector<1x1x128xf32> to vector<8x8x128xf32>
    %62 = arith.mulf %57, %61 : vector<8x8x128xf32>
    %63 = arith.addf %56, %62 : vector<8x8x128xf32>
    %c2_38 = arith.constant 2 : index
    %c0_39 = arith.constant 0 : index
    %c0_40 = arith.constant 0 : index
    %64 = vector.load %arg9[%c2_38, %c0_39, %c0_40] : memref<10x10x128xf32, #tpu.memory_space<vmem>>, vector<8x8x128xf32>
    %65 = vector.extract_strided_slice %19 {offsets = [2, 0, 0], sizes = [1, 1, 128], strides = [1, 1, 1]} : vector<3x3x128xf32> to vector<1x1x128xf32>
    %66 = vector.shape_cast %65 : vector<1x1x128xf32> to vector<128xf32>
    %67 = vector.shape_cast %66 : vector<128xf32> to vector<1x1x128xf32>
    %68 = vector.broadcast %67 : vector<1x1x128xf32> to vector<8x8x128xf32>
    %69 = arith.mulf %64, %68 : vector<8x8x128xf32>
    %70 = arith.addf %63, %69 : vector<8x8x128xf32>
    %c2_41 = arith.constant 2 : index
    %c1_42 = arith.constant 1 : index
    %c0_43 = arith.constant 0 : index
    %71 = vector.load %arg9[%c2_41, %c1_42, %c0_43] : memref<10x10x128xf32, #tpu.memory_space<vmem>>, vector<8x8x128xf32>
    %72 = vector.extract_strided_slice %19 {offsets = [2, 1, 0], sizes = [1, 1, 128], strides = [1, 1, 1]} : vector<3x3x128xf32> to vector<1x1x128xf32>
    %73 = vector.shape_cast %72 : vector<1x1x128xf32> to vector<128xf32>
    %74 = vector.shape_cast %73 : vector<128xf32> to vector<1x1x128xf32>
    %75 = vector.broadcast %74 : vector<1x1x128xf32> to vector<8x8x128xf32>
    %76 = arith.mulf %71, %75 : vector<8x8x128xf32>
    %77 = arith.addf %70, %76 : vector<8x8x128xf32>
    %c2_44 = arith.constant 2 : index
    %c2_45 = arith.constant 2 : index
    %c0_46 = arith.constant 0 : index
    %78 = vector.load %arg9[%c2_44, %c2_45, %c0_46] : memref<10x10x128xf32, #tpu.memory_space<vmem>>, vector<8x8x128xf32>
    %79 = vector.extract_strided_slice %19 {offsets = [2, 2, 0], sizes = [1, 1, 128], strides = [1, 1, 1]} : vector<3x3x128xf32> to vector<1x1x128xf32>
    %80 = vector.shape_cast %79 : vector<1x1x128xf32> to vector<128xf32>
    %81 = vector.shape_cast %80 : vector<128xf32> to vector<1x1x128xf32>
    %82 = vector.broadcast %81 : vector<1x1x128xf32> to vector<8x8x128xf32>
    %83 = arith.mulf %78, %82 : vector<8x8x128xf32>
    %84 = arith.addf %77, %83 : vector<8x8x128xf32>
    %85 = vector.shape_cast %20 : vector<1x128xf32> to vector<1x1x128xf32>
    %86 = vector.broadcast %85 : vector<1x1x128xf32> to vector<8x8x128xf32>
    %87 = arith.addf %84, %86 : vector<8x8x128xf32>
    %cst_47 = arith.constant 5.000000e-01 : f32
    %88 = vector.broadcast %cst_47 : f32 to vector<8x8x128xf32>
    %89 = arith.mulf %88, %87 : vector<8x8x128xf32>
    %cst_48 = arith.constant 0.707106769 : f32
    %90 = vector.broadcast %cst_48 : f32 to vector<8x8x128xf32>
    %91 = arith.mulf %87, %90 : vector<8x8x128xf32>
    %92 = math.erf %91 : vector<8x8x128xf32>
    %cst_49 = arith.constant 1.000000e+00 : f32
    %93 = vector.broadcast %cst_49 : f32 to vector<8x8x128xf32>
    %94 = arith.addf %93, %92 : vector<8x8x128xf32>
    %95 = arith.mulf %89, %94 : vector<8x8x128xf32>
    %96 = vector.shape_cast %95 : vector<8x8x128xf32> to vector<64x128xf32>
    %c0_50 = arith.constant 0 : index
    %c0_51 = arith.constant 0 : index
    %97 = vector.load %arg6[%c0_50, %c0_51] : memref<128x32xf32, #tpu.memory_space<vmem>>, vector<128x32xf32>
    %cst_52 = arith.constant dense<0.000000e+00> : vector<64x32xf32>
    %98 = tpu.matmul %96, %97, %cst_52 {dimension_numbers = #tpu.dot_dimension_numbers<[1], [0], [0], [1], [0, 0, 1, 1], [], []>} : vector<64x128xf32>, vector<128x32xf32>, vector<64x32xf32> -> vector<64x32xf32>
    %c0_53 = arith.constant 0 : index
    %c0_54 = arith.constant 0 : index
    %99 = vector.load %arg7[%c0_53, %c0_54] : memref<1x32xf32, #tpu.memory_space<vmem>>, vector<1x32xf32>
    %100 = vector.broadcast %99 : vector<1x32xf32> to vector<64x32xf32>
    %101 = arith.addf %98, %100 : vector<64x32xf32>
    %c0_55 = arith.constant 0 : index
    %c0_56 = arith.constant 0 : index
    %c0_57 = arith.constant 0 : index
    %102 = vector.load %arg8[%c0_55, %c0_56, %c0_57] : memref<1x64x32xf32, #tpu.memory_space<vmem>>, vector<1x64x32xf32>
    %103 = vector.shape_cast %102 : vector<1x64x32xf32> to vector<64x32xf32>
    %104 = vector.shape_cast %101 : vector<64x32xf32> to vector<1x64x32xf32>
    tpu.vector_store %arg8[%c0_55, %c0_56, %c0_57], %104 {strides = array<i32>} : memref<1x64x32xf32, #tpu.memory_space<vmem>>, vector<1x64x32xf32>,
    return
  }
  func.func @transform_0(%arg0: i32) -> (i32, i32, i32) {
    %c0_i32 = arith.constant 0 : i32
    %c0_i32_0 = arith.constant 0 : i32
    %c0_i32_1 = arith.constant 0 : i32
    return %arg0, %c0_i32, %c0_i32_0 : i32, i32, i32
  }
  func.func @transform_1(%arg0: i32) -> (i32, i32) {
    %c0_i32 = arith.constant 0 : i32
    %c0_i32_0 = arith.constant 0 : i32
    %c0_i32_1 = arith.constant 0 : i32
    return %c0_i32, %c0_i32_0 : i32, i32
  }
  func.func @transform_2(%arg0: i32) -> (i32, i32) {
    %c0_i32 = arith.constant 0 : i32
    %c0_i32_0 = arith.constant 0 : i32
    %c0_i32_1 = arith.constant 0 : i32
    return %c0_i32, %c0_i32_0 : i32, i32
  }
  func.func @transform_3(%arg0: i32) -> (i32, i32, i32) {
    %c0_i32 = arith.constant 0 : i32
    %c0_i32_0 = arith.constant 0 : i32
    %c0_i32_1 = arith.constant 0 : i32
    %c0_i32_2 = arith.constant 0 : i32
    return %c0_i32, %c0_i32_0, %c0_i32_1 : i32, i32, i32
  }
  func.func @transform_4(%arg0: i32) -> (i32, i32) {
    %c0_i32 = arith.constant 0 : i32
    %c0_i32_0 = arith.constant 0 : i32
    %c0_i32_1 = arith.constant 0 : i32
    return %c0_i32, %c0_i32_0 : i32, i32
  }
  func.func @transform_5(%arg0: i32) -> (i32, i32) {
    %c0_i32 = arith.constant 0 : i32
    %c0_i32_0 = arith.constant 0 : i32
    %c0_i32_1 = arith.constant 0 : i32
    return %c0_i32, %c0_i32_0 : i32, i32
  }
  func.func @transform_6(%arg0: i32) -> (i32, i32) {
    %c0_i32 = arith.constant 0 : i32
    %c0_i32_0 = arith.constant 0 : i32
    %c0_i32_1 = arith.constant 0 : i32
    return %c0_i32, %c0_i32_0 : i32, i32
  }
  func.func @transform_7(%arg0: i32) -> (i32, i32, i32) {
    %c0_i32 = arith.constant 0 : i32
    %c0_i32_0 = arith.constant 0 : i32
    %c0_i32_1 = arith.constant 0 : i32
    return %arg0, %c0_i32, %c0_i32_0 : i32, i32, i32
  }
}

</mosaic_0001>

<llo_original>
// kernel: leff_forward.1
$region0: #{leff_forward.1}
  #allocation0 [shape = 'u32[]', space=smem, size = 0x4, offset = 0x4, fixed_abs, tag = 'smem constant byte address 0x4 - core index']
  #allocation1 [shape = 'u32[144,128]{1,0:T(1,128)}', space=vmem, size = 0x12000, scoped, tag = 'internal scratch']
  #allocation2 [shape = 'f32[10,10,128]{2,1,0:T(8,128)}', space=vmem, size = 0x14000, scoped, tag = 'scratch operand']
  %s0 = inlined_call_operand.vmem [shape: f32[2,64,32], index: 0, kind: input, shape index: {}]
  %s1 = inlined_call_operand.vmem [shape: f32[32,128], index: 1, kind: input, shape index: {}]
  %s2 = inlined_call_operand.vmem [shape: f32[1,128], index: 2, kind: input, shape index: {}]
  %s3 = inlined_call_operand.vmem [shape: f32[3,3,128], index: 3, kind: input, shape index: {}]
  %s4 = inlined_call_operand.vmem [shape: f32[1,128], index: 4, kind: input, shape index: {}]
  %s5 = inlined_call_operand.vmem [shape: f32[128,32], index: 5, kind: input, shape index: {}]
  %s6 = inlined_call_operand.vmem [shape: f32[1,32], index: 6, kind: input, shape index: {}]
  %s7 = inlined_call_operand.vmem [shape: f32[2,64,32], index: 7, kind: output, shape index: {}]
  %s8 = sld [smem:[#allocation0]]
  $region61: #{leff_forward.1} parent=0
    _
  %s10 = ssub.s32 1, %s8
  %s11 = scalar_select 0, %s10, %s8
  loop: start=0, step=1, limit=4
  $region2: #{leff_forward.1} parent=0 // loop_pre_header
    _
  $region3: #{leff_forward.1} parent=0 // loop_header
    %s13 = sphi 0, %s17
    %p14 = scmp.ge.s32.totalorder %s13, 4
    %s23 = sphi 0, %s25
    %s26 = sphi 0, %s23
    %s27 = sphi 0, %s26
    %s43 = sphi 0, %s27
    %s47 = sphi 0, %s47
    %s49 = sphi 0, %s47
    %s50 = sphi 0, %s49
    %s64 = sphi 0, %s50
    %s68 = sphi 0, %s68
    %s70 = sphi 0, %s68
    %s71 = sphi 0, %s70
    %s85 = sphi 0, %s71
    %s89 = sphi 0, %s89
    %s91 = sphi 0, %s89
    %s92 = sphi 0, %s91
    %s106 = sphi 0, %s92
    %s110 = sphi 0, %s110
    %s112 = sphi 0, %s110
    %s113 = sphi 0, %s112
    %s127 = sphi 0, %s113
    %s131 = sphi 0, %s131
    %s133 = sphi 0, %s131
    %s134 = sphi 0, %s133
    %s148 = sphi 0, %s134
    %s152 = sphi 0, %s152
    %s154 = sphi 0, %s152
    %s155 = sphi 0, %s154
    %s169 = sphi 0, %s155
    %s175 = sphi 0, %s177
    %s178 = sphi 0, %s175
    %s179 = sphi 0, %s178
    %s195 = sphi 0, %s179
  $region4: #{leff_forward.1} parent=0 // loop_header_branch
    %16 = sbr.rel (%p14) target = $region8
  $region5: #{leff_forward.1} parent=0 // loop_body
    %s18 = ssub.s32 %s13, 1
    %s19 = ssub.s32 %s13, 2
    %s20 = sadd.s32 %s13, 1
    %s21 = ssub.s32 %s13, %s20
    %p22 = scmp.eq.s32.totalorder %s21, 0
    %s24 = sadd.s32 %s23, 1
    %s25 = scalar_select %p22, %s23, %s24
    %p28 = pneg %p22
    %p29 = scmp.eq.s32.totalorder %s13, 1
    %p30 = por %p28, %p29
    %p31 = scmp.ne.s32.totalorder %s23, %s26
    %p32 = scmp.eq.s32.totalorder %s13, 0
    %p33 = por %p31, %p32
    %p34 = scmp.ne.s32.totalorder %s23, %s26
    %p35 = scmp.eq.s32.totalorder %s18, 1
    %p36 = por %p34, %p35
    %p37 = scmp.ne.s32.totalorder %s26, %s27
    %p38 = scmp.eq.s32.totalorder %s18, 0
    %p39 = por %p37, %p38
    %p40 = scmp.ne.s32.totalorder %s26, %s27
    %p41 = scmp.eq.s32.totalorder %s19, 1
    %p42 = por %p40, %p41
    %p44 = scmp.ne.s32.totalorder %s27, %s43
    %p45 = scmp.eq.s32.totalorder %s19, 0
    %p46 = por %p44, %p45
    %s48 = sadd.s32 %s47, 1
    %p51 = scmp.eq.s32.totalorder %s13, 1
    %p52 = scmp.ne.s32.totalorder %s47, %s49
    %p53 = scmp.eq.s32.totalorder %s13, 0
    %p54 = por %p52, %p53
    %p55 = scmp.ne.s32.totalorder %s47, %s49
    %p56 = scmp.eq.s32.totalorder %s18, 1
    %p57 = por %p55, %p56
    %p58 = scmp.ne.s32.totalorder %s49, %s50
    %p59 = scmp.eq.s32.totalorder %s18, 0
    %p60 = por %p58, %p59
    %p61 = scmp.ne.s32.totalorder %s49, %s50
    %p62 = scmp.eq.s32.totalorder %s19, 1
    %p63 = por %p61, %p62
    %p65 = scmp.ne.s32.totalorder %s50, %s64
    %p66 = scmp.eq.s32.totalorder %s19, 0
    %p67 = por %p65, %p66
    %s69 = sadd.s32 %s68, 1
    %p72 = scmp.eq.s32.totalorder %s13, 1
    %p73 = scmp.ne.s32.totalorder %s68, %s70
    %p74 = scmp.eq.s32.totalorder %s13, 0
    %p75 = por %p73, %p74
    %p76 = scmp.ne.s32.totalorder %s68, %s70
    %p77 = scmp.eq.s32.totalorder %s18, 1
    %p78 = por %p76, %p77
    %p79 = scmp.ne.s32.totalorder %s70, %s71
    %p80 = scmp.eq.s32.totalorder %s18, 0
    %p81 = por %p79, %p80
    %p82 = scmp.ne.s32.totalorder %s70, %s71
    %p83 = scmp.eq.s32.totalorder %s19, 1
    %p84 = por %p82, %p83
    %p86 = scmp.ne.s32.totalorder %s71, %s85
    %p87 = scmp.eq.s32.totalorder %s19, 0
    %p88 = por %p86, %p87
    %s90 = sadd.s32 %s89, 1
    %p93 = scmp.eq.s32.totalorder %s13, 1
    %p94 = scmp.ne.s32.totalorder %s89, %s91
    %p95 = scmp.eq.s32.totalorder %s13, 0
    %p96 = por %p94, %p95
    %p97 = scmp.ne.s32.totalorder %s89, %s91
    %p98 = scmp.eq.s32.totalorder %s18, 1
    %p99 = por %p97, %p98
    %p100 = scmp.ne.s32.totalorder %s91, %s92
    %p101 = scmp.eq.s32.totalorder %s18, 0
    %p102 = por %p100, %p101
    %p103 = scmp.ne.s32.totalorder %s91, %s92
    %p104 = scmp.eq.s32.totalorder %s19, 1
    %p105 = por %p103, %p104
    %p107 = scmp.ne.s32.totalorder %s92, %s106
    %p108 = scmp.eq.s32.totalorder %s19, 0
    %p109 = por %p107, %p108
    %s111 = sadd.s32 %s110, 1
    %p114 = scmp.eq.s32.totalorder %s13, 1
    %p115 = scmp.ne.s32.totalorder %s110, %s112
    %p116 = scmp.eq.s32.totalorder %s13, 0
    %p117 = por %p115, %p116
    %p118 = scmp.ne.s32.totalorder %s110, %s112
    %p119 = scmp.eq.s32.totalorder %s18, 1
    %p120 = por %p118, %p119
    %p121 = scmp.ne.s32.totalorder %s112, %s113
    %p122 = scmp.eq.s32.totalorder %s18, 0
    %p123 = por %p121, %p122
    %p124 = scmp.ne.s32.totalorder %s112, %s113
    %p125 = scmp.eq.s32.totalorder %s19, 1
    %p126 = por %p124, %p125
    %p128 = scmp.ne.s32.totalorder %s113, %s127
    %p129 = scmp.eq.s32.totalorder %s19, 0
    %p130 = por %p128, %p129
    %s132 = sadd.s32 %s131, 1
    %p135 = scmp.eq.s32.totalorder %s13, 1
    %p136 = scmp.ne.s32.totalorder %s131, %s133
    %p137 = scmp.eq.s32.totalorder %s13, 0
    %p138 = por %p136, %p137
    %p139 = scmp.ne.s32.totalorder %s131, %s133
    %p140 = scmp.eq.s32.totalorder %s18, 1
    %p141 = por %p139, %p140
    %p142 = scmp.ne.s32.totalorder %s133, %s134
    %p143 = scmp.eq.s32.totalorder %s18, 0
    %p144 = por %p142, %p143
    %p145 = scmp.ne.s32.totalorder %s133, %s134
    %p146 = scmp.eq.s32.totalorder %s19, 1
    %p147 = por %p145, %p146
    %p149 = scmp.ne.s32.totalorder %s134, %s148
    %p150 = scmp.eq.s32.totalorder %s19, 0
    %p151 = por %p149, %p150
    %s153 = sadd.s32 %s152, 1
    %p156 = scmp.eq.s32.totalorder %s13, 1
    %p157 = scmp.ne.s32.totalorder %s152, %s154
    %p158 = scmp.eq.s32.totalorder %s13, 0
    %p159 = por %p157, %p158
    %p160 = scmp.ne.s32.totalorder %s152, %s154
    %p161 = scmp.eq.s32.totalorder %s18, 1
    %p162 = por %p160, %p161
    %p163 = scmp.ne.s32.totalorder %s154, %s155
    %p164 = scmp.eq.s32.totalorder %s18, 0
    %p165 = por %p163, %p164
    %p166 = scmp.ne.s32.totalorder %s154, %s155
    %p167 = scmp.eq.s32.totalorder %s19, 1
    %p168 = por %p166, %p167
    %p170 = scmp.ne.s32.totalorder %s155, %s169
    %p171 = scmp.eq.s32.totalorder %s19, 0
    %p172 = por %p170, %p171
    %s173 = ssub.s32 %s13, %s20
    %p174 = scmp.eq.s32.totalorder %s173, 0
    %s176 = sadd.s32 %s175, 1
    %s177 = scalar_select %p174, %s175, %s176
    %p180 = pneg %p174
    %p181 = scmp.eq.s32.totalorder %s13, 1
    %p182 = por %p180, %p181
    %p183 = scmp.ne.s32.totalorder %s175, %s178
    %p184 = scmp.eq.s32.totalorder %s13, 0
    %p185 = por %p183, %p184
    %p186 = scmp.ne.s32.totalorder %s175, %s178
    %p187 = scmp.eq.s32.totalorder %s18, 1
    %p188 = por %p186, %p187
    %p189 = scmp.ne.s32.totalorder %s178, %s179
    %p190 = scmp.eq.s32.totalorder %s18, 0
    %p191 = por %p189, %p190
    %p192 = scmp.ne.s32.totalorder %s178, %s179
    %p193 = scmp.eq.s32.totalorder %s19, 1
    %p194 = por %p192, %p193
    %p196 = scmp.ne.s32.totalorder %s179, %s195
    %p197 = scmp.eq.s32.totalorder %s19, 0
    %p198 = por %p196, %p197
    %p199 = scmp.le.s32.totalorder 1, %s13
    %p200 = scmp.lt.s32.totalorder %s13, 3
    %p201 = pnand %p199, %p200
    %p202 = pneg %p201
    // Predicated region
    $region9: #{leff_forward.1} parent=5 // pred_check
      _
    $region10: #{leff_forward.1} parent=5 // pred_check_branch
      %204 = sbr.rel (%p201) target = $region12
    $region11: #{leff_forward.1} parent=5 // pred_region
      %s205 = ssub.s32 %s13, 1
      // Predicated region
      $region13: #{leff_forward.1} parent=11 // pred_check
        %p206 = pneg %p60
      $region14: #{leff_forward.1} parent=11 // pred_check_branch
        %208 = sbr.rel (%p206) target = $region16
      $region15: #{leff_forward.1} parent=11 // pred_region
        _
      $region16: #{leff_forward.1} parent=11 // pred_fallthru
        _
      // Predicated region
      $region17: #{leff_forward.1} parent=11 // pred_check
        %p209 = pneg %p81
      $region18: #{leff_forward.1} parent=11 // pred_check_branch
        %211 = sbr.rel (%p209) target = $region20
      $region19: #{leff_forward.1} parent=11 // pred_region
        _
      $region20: #{leff_forward.1} parent=11 // pred_fallthru
        _
      // Predicated region
      $region21: #{leff_forward.1} parent=11 // pred_check
        %p212 = pneg %p102
      $region22: #{leff_forward.1} parent=11 // pred_check_branch
        %214 = sbr.rel (%p212) target = $region24
      $region23: #{leff_forward.1} parent=11 // pred_region
        _
      $region24: #{leff_forward.1} parent=11 // pred_fallthru
        _
      // Predicated region
      $region25: #{leff_forward.1} parent=11 // pred_check
        %p215 = pneg %p123
      $region26: #{leff_forward.1} parent=11 // pred_check_branch
        %217 = sbr.rel (%p215) target = $region28
      $region27: #{leff_forward.1} parent=11 // pred_region
        _
      $region28: #{leff_forward.1} parent=11 // pred_fallthru
        _
      // Predicated region
      $region29: #{leff_forward.1} parent=11 // pred_check
        %p218 = pneg %p144
      $region30: #{leff_forward.1} parent=11 // pred_check_branch
        %220 = sbr.rel (%p218) target = $region32
      $region31: #{leff_forward.1} parent=11 // pred_region
        _
      $region32: #{leff_forward.1} parent=11 // pred_fallthru
        _
      // Predicated region
      $region33: #{leff_forward.1} parent=11 // pred_check
        %p221 = pneg %p165
      $region34: #{leff_forward.1} parent=11 // pred_check_branch
        %223 = sbr.rel (%p221) target = $region36
      $region35: #{leff_forward.1} parent=11 // pred_region
        _
      $region36: #{leff_forward.1} parent=11 // pred_fallthru
        _
    $region12: #{leff_forward.1} parent=5 // pred_fallthru
      _
    %p224 = scmp.lt.s32.totalorder %s13, 2
    // Predicated region
    $region37: #{leff_forward.1} parent=5 // pred_check
      %p225 = pneg %p224
    $region38: #{leff_forward.1} parent=5 // pred_check_branch
      %227 = sbr.rel (%p225) target = $region40
    $region39: #{leff_forward.1} parent=5 // pred_region
      // Predicated region
      $region41: #{leff_forward.1} parent=39 // pred_check
        %p228 = pneg %p33
      $region42: #{leff_forward.1} parent=39 // pred_check_branch
        %230 = sbr.rel (%p228) target = $region44
      $region43: #{leff_forward.1} parent=39 // pred_region
        %p231 = scmp.lt.s32.totalorder %s13, 1
        %s232 = scalar_select %p231, %s13, 1
        %s233 = smul.addr %s232, 8
        %s234 = smul.addr %s233, 8
        %s235 = scalar_lea.vmem %s0, %s234
      $region44: #{leff_forward.1} parent=39 // pred_fallthru
        _
    $region40: #{leff_forward.1} parent=5 // pred_fallthru
      _
    %p236 = scmp.le.s32.totalorder 1, %s13
    %p237 = scmp.lt.s32.totalorder %s13, 3
    %p238 = pnand %p236, %p237
    %p239 = pneg %p238
    // Predicated region
    $region45: #{leff_forward.1} parent=5 // pred_check
      _
    $region46: #{leff_forward.1} parent=5 // pred_check_branch
      %241 = sbr.rel (%p238) target = $region48
    $region47: #{leff_forward.1} parent=5 // pred_region
      %s242 = ssub.s32 %s13, 1
      %p243 = scmp.lt.s32.totalorder %s18, 1
      %s244 = scalar_select %p243, %s18, 1
      %s245 = smul.addr %s244, 8
      %s246 = smul.addr %s245, 8
      %s247 = scalar_lea.vmem %s0, %s246
      %p248 = pneg %p39
      %p249 = pneg %p36
      %p250 = pneg %p60
      %p251 = pneg %p57
      %p252 = pneg %p81
      %p253 = pneg %p78
      %p254 = pneg %p102
      %p255 = pneg %p99
      %p256 = pneg %p123
      %p257 = pneg %p120
      %p258 = pneg %p144
      %p259 = pneg %p141
      %p260 = pneg %p165
      %p261 = pneg %p162
      %p262 = pneg %p191
      %p263 = pneg %p188
      %p264 = scmp.lt.s32.totalorder %s18, 1
      %s265 = scalar_select %p264, %s18, 1
      %s266 = smul.addr %s265, 8
      %s267 = smul.addr %s266, 8
      %s268 = scalar_lea.vmem %s7, %s267
      %p269 = scmp.lt.s32.totalorder %s18, 1
      %s270 = scalar_select %p269, %s18, 1
      %s271 = smul.addr %s270, 8
      %s272 = smul.addr %s271, 8
      %s273 = scalar_lea.vmem %s0, %s272
      %p274 = scmp.lt.s32.totalorder %s18, 1
      %s275 = scalar_select %p274, %s18, 1
      %s276 = smul.addr %s275, 8
      %s277 = smul.addr %s276, 8
      %s278 = scalar_lea.vmem %s7, %s277
      %279 = vst [vmem:[#allocation2] sm:$0xff] 0.0
      %280 = vst [vmem:[#allocation2 + $0x8] sm:$0x3] 0.0
      %281 = vst [vmem:[#allocation2 + $0x10] sm:$0xff] 0.0
      %282 = vst [vmem:[#allocation2 + $0x18] sm:$0x3] 0.0
      %283 = vst [vmem:[#allocation2 + $0x20] sm:$0xff] 0.0
      %284 = vst [vmem:[#allocation2 + $0x28] sm:$0x3] 0.0
      %285 = vst [vmem:[#allocation2 + $0x30] sm:$0xff] 0.0
      %286 = vst [vmem:[#allocation2 + $0x38] sm:$0x3] 0.0
      %287 = vst [vmem:[#allocation2 + $0x40] sm:$0xff] 0.0
      %288 = vst [vmem:[#allocation2 + $0x48] sm:$0x3] 0.0
      %289 = vst [vmem:[#allocation2 + $0x50] sm:$0xff] 0.0
      %290 = vst [vmem:[#allocation2 + $0x58] sm:$0x3] 0.0
      %291 = vst [vmem:[#allocation2 + $0x60] sm:$0xff] 0.0
      %292 = vst [vmem:[#allocation2 + $0x68] sm:$0x3] 0.0
      %293 = vst [vmem:[#allocation2 + $0x70] sm:$0xff] 0.0
      %294 = vst [vmem:[#allocation2 + $0x78] sm:$0x3] 0.0
      %295 = vst [vmem:[#allocation2 + $0x80] sm:$0xff] 0.0
      %296 = vst [vmem:[#allocation2 + $0x88] sm:$0x3] 0.0
      %297 = vst [vmem:[#allocation2 + $0x90] sm:$0xff] 0.0
      %298 = vst [vmem:[#allocation2 + $0x98] sm:$0x3] 0.0
      %v299 = vld [vmem:[%s273] sm:$0xff]
      %v300 = vld [vmem:[%s273 + $0x8] sm:$0xff]
      %v301 = vld [vmem:[%s273 + $0x10] sm:$0xff]
      %v302 = vld [vmem:[%s273 + $0x18] sm:$0xff]
      %v303 = vld [vmem:[%s273 + $0x20] sm:$0xff]
      %v304 = vld [vmem:[%s273 + $0x28] sm:$0xff]
      %v305 = vld [vmem:[%s273 + $0x30] sm:$0xff]
      %v306 = vld [vmem:[%s273 + $0x38] sm:$0xff]
      %v307 = vld [vmem:[%s1] sm:$0xff]
      %v308 = vld [vmem:[%s1 + $0x8] sm:$0xff]
      %v309 = vld [vmem:[%s1 + $0x10] sm:$0xff]
      %v310 = vld [vmem:[%s1 + $0x18] sm:$0xff]
      %v311 = vld [vmem:[%s2] sm:$0x1]
      %v313 = vlaneseq
      %v314 = vshrl.u32 %v313, 7
      %v315 = vsub.s32 0, %v314
      %v316 = vrot.slane %v311, %v315
      %vm318 = vcmask 261120
      %v320 = vsel %vm318, %v299, 0
      %v323 = vsel %vm318, %v300, 0
      %v326 = vsel %vm318, %v301, 0
      %v329 = vsel %vm318, %v302, 0
      %v332 = vsel %vm318, %v303, 0
      %v335 = vsel %vm318, %v304, 0
      %v338 = vsel %vm318, %v305, 0
      %v341 = vsel %vm318, %v306, 0
      %343 = vmatprep.subr.mxu0 0.0
      %344 = vmatpush1.msra.mxu0 0.0
      %345 = vmatprep.subr.mxu0 0.0
      %346 = vmatpush1.msra.mxu0 0.0
      %347 = vmatprep.subr.mxu0 0.0
      %348 = vmatpush1.msra.mxu0 0.0
      %349 = vmatprep.subr.mxu0 0.0
      %350 = vmatpush1.msra.mxu0 0.0
      %351 = vmatprep.subr.mxu0 0.0
      %352 = vmatpush1.msra.mxu0 0.0
      %353 = vmatprep.subr.mxu0 0.0
      %354 = vmatpush1.msra.mxu0 0.0
      %355 = vmatprep.subr.mxu0 0.0
      %356 = vmatpush1.msra.mxu0 0.0
      %357 = vmatprep.subr.mxu0 0.0
      %358 = vmatpush1.msra.mxu0 0.0
      %359 = vmatprep.subr.mxu0 0.0
      %360 = vmatpush1.msra.mxu0 0.0
      %361 = vmatprep.subr.mxu0 0.0
      %362 = vmatpush1.msra.mxu0 0.0
      %363 = vmatprep.subr.mxu0 0.0
      %364 = vmatpush1.msra.mxu0 0.0
      %365 = vmatprep.subr.mxu0 0.0
      %366 = vmatpush1.msra.mxu0 0.0
      %367 = vmatprep.subr.mxu0 0.0
      %368 = vmatpush1.msra.mxu0 %v310
      %369 = vmatprep.subr.mxu0 0.0
      %370 = vmatpush1.msra.mxu0 %v309
      %371 = vmatprep.subr.mxu0 0.0
      %372 = vmatpush1.msra.mxu0 %v308
      %373 = vmatprep.subr.mxu0 0.0
      %374 = vmatpush1.msra.mxu0 %v307
      %375 = vmatprep.subr.mxu0 0.0
      %376 = vmatpush2.msra.mxu0 0.0
      %377 = vmatprep.subr.mxu0 0.0
      %378 = vmatpush2.msra.mxu0 0.0
      %379 = vmatprep.subr.mxu0 0.0
      %380 = vmatpush2.msra.mxu0 0.0
      %381 = vmatprep.subr.mxu0 0.0
      %382 = vmatpush2.msra.mxu0 0.0
      %383 = vmatprep.subr.mxu0 0.0
      %384 = vmatpush2.msra.mxu0 0.0
      %385 = vmatprep.subr.mxu0 0.0
      %386 = vmatpush2.msra.mxu0 0.0
      %387 = vmatprep.subr.mxu0 0.0
      %388 = vmatpush2.msra.mxu0 0.0
      %389 = vmatprep.subr.mxu0 0.0
      %390 = vmatpush2.msra.mxu0 0.0
      %391 = vmatprep.subr.mxu0 0.0
      %392 = vmatpush2.msra.mxu0 0.0
      %393 = vmatprep.subr.mxu0 0.0
      %394 = vmatpush2.msra.mxu0 0.0
      %395 = vmatprep.subr.mxu0 0.0
      %396 = vmatpush2.msra.mxu0 0.0
      %397 = vmatprep.subr.mxu0 0.0
      %398 = vmatpush2.msra.mxu0 0.0
      %399 = vmatprep.subr.mxu0 0.0
      %400 = vmatpush2.msra.mxu0 0.0
      %401 = vmatprep.subr.mxu0 0.0
      %402 = vmatpush2.msra.mxu0 0.0
      %403 = vmatprep.subr.mxu0 0.0
      %404 = vmatpush2.msra.mxu0 0.0
      %405 = vmatprep.subr.mxu0 0.0
      %406 = vmatpush2.msra.mxu0 0.0
      %407 = vmatprep.mubr.f32.mxu0 0.0
      %408 = vmatmul.mubr.f32.gmra.mxu0 %v320
      %v409 = vpop.f32.mrf.mxu0
      %v410 = vadd.f32 %v316, %v409
      %v411 = vpop.f32.mrf.mxu0
      %412 = vmatprep.mubr.f32.mxu0 0.0
      %413 = vmatmul.mubr.f32.gmra.mxu0 %v323
      %v414 = vpop.f32.mrf.mxu0
      %v415 = vadd.f32 %v316, %v414
      %v416 = vpop.f32.mrf.mxu0
      %417 = vmatprep.mubr.f32.mxu0 0.0
      %418 = vmatmul.mubr.f32.gmra.mxu0 %v326
      %v419 = vpop.f32.mrf.mxu0
      %v420 = vadd.f32 %v316, %v419
      %v421 = vpop.f32.mrf.mxu0
      %422 = vmatprep.mubr.f32.mxu0 0.0
      %423 = vmatmul.mubr.f32.gmra.mxu0 %v329
      %v424 = vpop.f32.mrf.mxu0
      %v425 = vadd.f32 %v316, %v424
      %v426 = vpop.f32.mrf.mxu0
      %427 = vmatprep.mubr.f32.mxu0 0.0
      %428 = vmatmul.mubr.f32.gmra.mxu0 %v332
      %v429 = vpop.f32.mrf.mxu0
      %v430 = vadd.f32 %v316, %v429
      %v431 = vpop.f32.mrf.mxu0
      %432 = vmatprep.mubr.f32.mxu0 0.0
      %433 = vmatmul.mubr.f32.gmra.mxu0 %v335
      %v434 = vpop.f32.mrf.mxu0
      %v435 = vadd.f32 %v316, %v434
      %v436 = vpop.f32.mrf.mxu0
      %437 = vmatprep.mubr.f32.mxu0 0.0
      %438 = vmatmul.mubr.f32.gmra.mxu0 %v338
      %v439 = vpop.f32.mrf.mxu0
      %v440 = vadd.f32 %v316, %v439
      %v441 = vpop.f32.mrf.mxu0
      %442 = vmatprep.mubr.f32.mxu0 0.0
      %443 = vmatmul.mubr.f32.gmra.mxu0 %v341
      %v444 = vpop.f32.mrf.mxu0
      %v445 = vadd.f32 %v316, %v444
      %v446 = vpop.f32.mrf.mxu0
      %447 = vdwg.mxu0
      %v448 = vmul.f32 %v410, 0.5
      %v449 = vmul.f32 %v415, 0.5
      %v450 = vmul.f32 %v420, 0.5
      %v451 = vmul.f32 %v425, 0.5
      %v452 = vmul.f32 %v430, 0.5
      %v453 = vmul.f32 %v435, 0.5
      %v454 = vmul.f32 %v440, 0.5
      %v455 = vmul.f32 %v445, 0.5
      %v456 = vmul.f32 %v410, 0.70710677
      %v457 = vmul.f32 %v415, 0.70710677
      %v458 = vmul.f32 %v420, 0.70710677
      %v459 = vmul.f32 %v425, 0.70710677
      %v460 = vmul.f32 %v430, 0.70710677
      %v461 = vmul.f32 %v435, 0.70710677
      %v462 = vmul.f32 %v440, 0.70710677
      %v463 = vmul.f32 %v445, 0.70710677
      %v464 = verf.f32.pop %v456
      %v465 = verf.f32.pop %v457
      %v466 = verf.f32.pop %v458
      %v467 = verf.f32.pop %v459
      %v468 = verf.f32.pop %v460
      %v469 = verf.f32.pop %v461
      %v470 = verf.f32.pop %v462
      %v471 = verf.f32.pop %v463
      %v472 = vadd.f32 %v464, 1.0
      %v473 = vadd.f32 %v465, 1.0
      %v474 = vadd.f32 %v466, 1.0
      %v475 = vadd.f32 %v467, 1.0
      %v476 = vadd.f32 %v468, 1.0
      %v477 = vadd.f32 %v469, 1.0
      %v478 = vadd.f32 %v470, 1.0
      %v479 = vadd.f32 %v471, 1.0
      %v480 = vmul.f32 %v448, %v472
      %v481 = vmul.f32 %v449, %v473
      %v482 = vmul.f32 %v450, %v474
      %v483 = vmul.f32 %v451, %v475
      %v484 = vmul.f32 %v452, %v476
      %v485 = vmul.f32 %v453, %v477
      %v486 = vmul.f32 %v454, %v478
      %v487 = vmul.f32 %v455, %v479
      %s488 = scalar_lea.vmem [#allocation2], 16
      %489 = vst [vmem:[%s488 + $0x1] sm:$0xff] %v480
      %490 = vst [vmem:[%s488 + $0x11] sm:$0xff] %v481
      %491 = vst [vmem:[%s488 + $0x21] sm:$0xff] %v482
      %492 = vst [vmem:[%s488 + $0x31] sm:$0xff] %v483
      %493 = vst [vmem:[%s488 + $0x41] sm:$0xff] %v484
      %494 = vst [vmem:[%s488 + $0x51] sm:$0xff] %v485
      %495 = vst [vmem:[%s488 + $0x61] sm:$0xff] %v486
      %496 = vst [vmem:[%s488 + $0x71] sm:$0xff] %v487
      %v497 = vld [vmem:[%s3] sm:$0x7]
      %v498 = vld [vmem:[%s3 + $0x4] sm:$0x7]
      %v499 = vld [vmem:[%s3 + $0x8] sm:$0x7]
      %v500 = vld [vmem:[%s4] sm:$0x1]
      %v501 = vld [vmem:[#allocation2] sm:$0xff]
      %v502 = vld [vmem:[#allocation2 + $0x10] sm:$0xff]
      %v503 = vld [vmem:[#allocation2 + $0x20] sm:$0xff]
      %v504 = vld [vmem:[#allocation2 + $0x30] sm:$0xff]
      %v505 = vld [vmem:[#allocation2 + $0x40] sm:$0xff]
      %v506 = vld [vmem:[#allocation2 + $0x50] sm:$0xff]
      %v507 = vld [vmem:[#allocation2 + $0x60] sm:$0xff]
      %v508 = vld [vmem:[#allocation2 + $0x70] sm:$0xff]
      %v509 = vlaneseq
      %v510 = vshrl.u32 %v509, 7
      %v511 = vsub.s32 0, %v510
      %v512 = vrot.slane %v497, %v511
      %v513 = vmul.f32 %v501, %v512
      %v514 = vmul.f32 %v502, %v512
      %v515 = vmul.f32 %v503, %v512
      %v516 = vmul.f32 %v504, %v512
      %v517 = vmul.f32 %v505, %v512
      %v518 = vmul.f32 %v506, %v512
      %v519 = vmul.f32 %v507, %v512
      %v520 = vmul.f32 %v508, %v512
      %v521 = vadd.f32 %v513, 0.0
      %v522 = vadd.f32 %v514, 0.0
      %v523 = vadd.f32 %v515, 0.0
      %v524 = vadd.f32 %v516, 0.0
      %v525 = vadd.f32 %v517, 0.0
      %v526 = vadd.f32 %v518, 0.0
      %v527 = vadd.f32 %v519, 0.0
      %v528 = vadd.f32 %v520, 0.0
      %v529 = vld [vmem:[#allocation2 + $0x1] sm:$0xff]
      %v530 = vld [vmem:[#allocation2 + $0x11] sm:$0xff]
      %v531 = vld [vmem:[#allocation2 + $0x21] sm:$0xff]
      %v532 = vld [vmem:[#allocation2 + $0x31] sm:$0xff]
      %v533 = vld [vmem:[#allocation2 + $0x41] sm:$0xff]
      %v534 = vld [vmem:[#allocation2 + $0x51] sm:$0xff]
      %v535 = vld [vmem:[#allocation2 + $0x61] sm:$0xff]
      %v536 = vld [vmem:[#allocation2 + $0x71] sm:$0xff]
      %v537 = vlaneseq
      %v538 = vshrl.u32 %v537, 7
      %v539 = vsub.s32 1, %v538
      %v540 = vrot.slane %v497, %v539
      %v541 = vmul.f32 %v529, %v540
      %v542 = vmul.f32 %v530, %v540
      %v543 = vmul.f32 %v531, %v540
      %v544 = vmul.f32 %v532, %v540
      %v545 = vmul.f32 %v533, %v540
      %v546 = vmul.f32 %v534, %v540
      %v547 = vmul.f32 %v535, %v540
      %v548 = vmul.f32 %v536, %v540
      %v549 = vadd.f32 %v521, %v541
      %v550 = vadd.f32 %v522, %v542
      %v551 = vadd.f32 %v523, %v543
      %v552 = vadd.f32 %v524, %v544
      %v553 = vadd.f32 %v525, %v545
      %v554 = vadd.f32 %v526, %v546
      %v555 = vadd.f32 %v527, %v547
      %v556 = vadd.f32 %v528, %v548
      %v557 = vld [vmem:[#allocation2 + $0x2] sm:$0xff]
      %v558 = vld [vmem:[#allocation2 + $0x12] sm:$0xff]
      %v559 = vld [vmem:[#allocation2 + $0x22] sm:$0xff]
      %v560 = vld [vmem:[#allocation2 + $0x32] sm:$0xff]
      %v561 = vld [vmem:[#allocation2 + $0x42] sm:$0xff]
      %v562 = vld [vmem:[#allocation2 + $0x52] sm:$0xff]
      %v563 = vld [vmem:[#allocation2 + $0x62] sm:$0xff]
      %v564 = vld [vmem:[#allocation2 + $0x72] sm:$0xff]
      %v565 = vlaneseq
      %v566 = vshrl.u32 %v565, 7
      %v567 = vsub.s32 2, %v566
      %v568 = vrot.slane %v497, %v567
      %v569 = vmul.f32 %v557, %v568
      %v570 = vmul.f32 %v558, %v568
      %v571 = vmul.f32 %v559, %v568
      %v572 = vmul.f32 %v560, %v568
      %v573 = vmul.f32 %v561, %v568
      %v574 = vmul.f32 %v562, %v568
      %v575 = vmul.f32 %v563, %v568
      %v576 = vmul.f32 %v564, %v568
      %v577 = vadd.f32 %v549, %v569
      %v578 = vadd.f32 %v550, %v570
      %v579 = vadd.f32 %v551, %v571
      %v580 = vadd.f32 %v552, %v572
      %v581 = vadd.f32 %v553, %v573
      %v582 = vadd.f32 %v554, %v574
      %v583 = vadd.f32 %v555, %v575
      %v584 = vadd.f32 %v556, %v576
      %v585 = vld [vmem:[%s488] sm:$0xff]
      %v586 = vld [vmem:[%s488 + $0x10] sm:$0xff]
      %v587 = vld [vmem:[%s488 + $0x20] sm:$0xff]
      %v588 = vld [vmem:[%s488 + $0x30] sm:$0xff]
      %v589 = vld [vmem:[%s488 + $0x40] sm:$0xff]
      %v590 = vld [vmem:[%s488 + $0x50] sm:$0xff]
      %v591 = vld [vmem:[%s488 + $0x60] sm:$0xff]
      %v592 = vld [vmem:[%s488 + $0x70] sm:$0xff]
      %v593 = vlaneseq
      %v594 = vshrl.u32 %v593, 7
      %v595 = vsub.s32 0, %v594
      %v596 = vrot.slane %v498, %v595
      %v597 = vmul.f32 %v585, %v596
      %v598 = vmul.f32 %v586, %v596
      %v599 = vmul.f32 %v587, %v596
      %v600 = vmul.f32 %v588, %v596
      %v601 = vmul.f32 %v589, %v596
      %v602 = vmul.f32 %v590, %v596
      %v603 = vmul.f32 %v591, %v596
      %v604 = vmul.f32 %v592, %v596
      %v605 = vadd.f32 %v577, %v597
      %v606 = vadd.f32 %v578, %v598
      %v607 = vadd.f32 %v579, %v599
      %v608 = vadd.f32 %v580, %v600
      %v609 = vadd.f32 %v581, %v601
      %v610 = vadd.f32 %v582, %v602
      %v611 = vadd.f32 %v583, %v603
      %v612 = vadd.f32 %v584, %v604
      %v613 = vld [vmem:[%s488 + $0x1] sm:$0xff]
      %v614 = vld [vmem:[%s488 + $0x11] sm:$0xff]
      %v615 = vld [vmem:[%s488 + $0x21] sm:$0xff]
      %v616 = vld [vmem:[%s488 + $0x31] sm:$0xff]
      %v617 = vld [vmem:[%s488 + $0x41] sm:$0xff]
      %v618 = vld [vmem:[%s488 + $0x51] sm:$0xff]
      %v619 = vld [vmem:[%s488 + $0x61] sm:$0xff]
      %v620 = vld [vmem:[%s488 + $0x71] sm:$0xff]
      %v621 = vlaneseq
      %v622 = vshrl.u32 %v621, 7
      %v623 = vsub.s32 1, %v622
      %v624 = vrot.slane %v498, %v623
      %v625 = vmul.f32 %v613, %v624
      %v626 = vmul.f32 %v614, %v624
      %v627 = vmul.f32 %v615, %v624
      %v628 = vmul.f32 %v616, %v624
      %v629 = vmul.f32 %v617, %v624
      %v630 = vmul.f32 %v618, %v624
      %v631 = vmul.f32 %v619, %v624
      %v632 = vmul.f32 %v620, %v624
      %v633 = vadd.f32 %v605, %v625
      %v634 = vadd.f32 %v606, %v626
      %v635 = vadd.f32 %v607, %v627
      %v636 = vadd.f32 %v608, %v628
      %v637 = vadd.f32 %v609, %v629
      %v638 = vadd.f32 %v610, %v630
      %v639 = vadd.f32 %v611, %v631
      %v640 = vadd.f32 %v612, %v632
      %v641 = vld [vmem:[%s488 + $0x2] sm:$0xff]
      %v642 = vld [vmem:[%s488 + $0x12] sm:$0xff]
      %v643 = vld [vmem:[%s488 + $0x22] sm:$0xff]
      %v644 = vld [vmem:[%s488 + $0x32] sm:$0xff]
      %v645 = vld [vmem:[%s488 + $0x42] sm:$0xff]
      %v646 = vld [vmem:[%s488 + $0x52] sm:$0xff]
      %v647 = vld [vmem:[%s488 + $0x62] sm:$0xff]
      %v648 = vld [vmem:[%s488 + $0x72] sm:$0xff]
      %v649 = vlaneseq
      %v650 = vshrl.u32 %v649, 7
      %v651 = vsub.s32 2, %v650
      %v652 = vrot.slane %v498, %v651
      %v653 = vmul.f32 %v641, %v652
      %v654 = vmul.f32 %v642, %v652
      %v655 = vmul.f32 %v643, %v652
      %v656 = vmul.f32 %v644, %v652
      %v657 = vmul.f32 %v645, %v652
      %v658 = vmul.f32 %v646, %v652
      %v659 = vmul.f32 %v647, %v652
      %v660 = vmul.f32 %v648, %v652
      %v661 = vadd.f32 %v633, %v653
      %v662 = vadd.f32 %v634, %v654
      %v663 = vadd.f32 %v635, %v655
      %v664 = vadd.f32 %v636, %v656
      %v665 = vadd.f32 %v637, %v657
      %v666 = vadd.f32 %v638, %v658
      %v667 = vadd.f32 %v639, %v659
      %v668 = vadd.f32 %v640, %v660
      %s669 = scalar_lea.vmem [#allocation2], 32
      %v670 = vld [vmem:[%s669] sm:$0xff]
      %v671 = vld [vmem:[%s669 + $0x10] sm:$0xff]
      %v672 = vld [vmem:[%s669 + $0x20] sm:$0xff]
      %v673 = vld [vmem:[%s669 + $0x30] sm:$0xff]
      %v674 = vld [vmem:[%s669 + $0x40] sm:$0xff]
      %v675 = vld [vmem:[%s669 + $0x50] sm:$0xff]
      %v676 = vld [vmem:[%s669 + $0x60] sm:$0xff]
      %v677 = vld [vmem:[%s669 + $0x70] sm:$0xff]
      %v678 = vlaneseq
      %v679 = vshrl.u32 %v678, 7
      %v680 = vsub.s32 0, %v679
      %v681 = vrot.slane %v499, %v680
      %v682 = vmul.f32 %v670, %v681
      %v683 = vmul.f32 %v671, %v681
      %v684 = vmul.f32 %v672, %v681
      %v685 = vmul.f32 %v673, %v681
      %v686 = vmul.f32 %v674, %v681
      %v687 = vmul.f32 %v675, %v681
      %v688 = vmul.f32 %v676, %v681
      %v689 = vmul.f32 %v677, %v681
      %v690 = vadd.f32 %v661, %v682
      %v691 = vadd.f32 %v662, %v683
      %v692 = vadd.f32 %v663, %v684
      %v693 = vadd.f32 %v664, %v685
      %v694 = vadd.f32 %v665, %v686
      %v695 = vadd.f32 %v666, %v687
      %v696 = vadd.f32 %v667, %v688
      %v697 = vadd.f32 %v668, %v689
      %v698 = vld [vmem:[%s669 + $0x1] sm:$0xff]
      %v699 = vld [vmem:[%s669 + $0x11] sm:$0xff]
      %v700 = vld [vmem:[%s669 + $0x21] sm:$0xff]
      %v701 = vld [vmem:[%s669 + $0x31] sm:$0xff]
      %v702 = vld [vmem:[%s669 + $0x41] sm:$0xff]
      %v703 = vld [vmem:[%s669 + $0x51] sm:$0xff]
      %v704 = vld [vmem:[%s669 + $0x61] sm:$0xff]
      %v705 = vld [vmem:[%s669 + $0x71] sm:$0xff]
      %v706 = vlaneseq
      %v707 = vshrl.u32 %v706, 7
      %v708 = vsub.s32 1, %v707
      %v709 = vrot.slane %v499, %v708
      %v710 = vmul.f32 %v698, %v709
      %v711 = vmul.f32 %v699, %v709
      %v712 = vmul.f32 %v700, %v709
      %v713 = vmul.f32 %v701, %v709
      %v714 = vmul.f32 %v702, %v709
      %v715 = vmul.f32 %v703, %v709
      %v716 = vmul.f32 %v704, %v709
      %v717 = vmul.f32 %v705, %v709
      %v718 = vadd.f32 %v690, %v710
      %v719 = vadd.f32 %v691, %v711
      %v720 = vadd.f32 %v692, %v712
      %v721 = vadd.f32 %v693, %v713
      %v722 = vadd.f32 %v694, %v714
      %v723 = vadd.f32 %v695, %v715
      %v724 = vadd.f32 %v696, %v716
      %v725 = vadd.f32 %v697, %v717
      %v726 = vld [vmem:[%s669 + $0x2] sm:$0xff]
      %v727 = vld [vmem:[%s669 + $0x12] sm:$0xff]
      %v728 = vld [vmem:[%s669 + $0x22] sm:$0xff]
      %v729 = vld [vmem:[%s669 + $0x32] sm:$0xff]
      %v730 = vld [vmem:[%s669 + $0x42] sm:$0xff]
      %v731 = vld [vmem:[%s669 + $0x52] sm:$0xff]
      %v732 = vld [vmem:[%s669 + $0x62] sm:$0xff]
      %v733 = vld [vmem:[%s669 + $0x72] sm:$0xff]
      %v734 = vlaneseq
      %v735 = vshrl.u32 %v734, 7
      %v736 = vsub.s32 2, %v735
      %v737 = vrot.slane %v499, %v736
      %v738 = vmul.f32 %v726, %v737
      %v739 = vmul.f32 %v727, %v737
      %v740 = vmul.f32 %v728, %v737
      %v741 = vmul.f32 %v729, %v737
      %v742 = vmul.f32 %v730, %v737
      %v743 = vmul.f32 %v731, %v737
      %v744 = vmul.f32 %v732, %v737
      %v745 = vmul.f32 %v733, %v737
      %v746 = vadd.f32 %v718, %v738
      %v747 = vadd.f32 %v719, %v739
      %v748 = vadd.f32 %v720, %v740
      %v749 = vadd.f32 %v721, %v741
      %v750 = vadd.f32 %v722, %v742
      %v751 = vadd.f32 %v723, %v743
      %v752 = vadd.f32 %v724, %v744
      %v753 = vadd.f32 %v725, %v745
      %v755 = vlaneseq
      %v756 = vshrl.u32 %v755, 7
      %v757 = vsub.s32 0, %v756
      %v758 = vrot.slane %v500, %v757
      %v760 = vadd.f32 %v746, %v758
      %v761 = vadd.f32 %v747, %v758
      %v762 = vadd.f32 %v748, %v758
      %v763 = vadd.f32 %v749, %v758
      %v764 = vadd.f32 %v750, %v758
      %v765 = vadd.f32 %v751, %v758
      %v766 = vadd.f32 %v752, %v758
      %v767 = vadd.f32 %v753, %v758
      %v768 = vmul.f32 %v760, 0.5
      %v769 = vmul.f32 %v761, 0.5
      %v770 = vmul.f32 %v762, 0.5
      %v771 = vmul.f32 %v763, 0.5
      %v772 = vmul.f32 %v764, 0.5
      %v773 = vmul.f32 %v765, 0.5
      %v774 = vmul.f32 %v766, 0.5
      %v775 = vmul.f32 %v767, 0.5
      %v776 = vmul.f32 %v760, 0.70710677
      %v777 = vmul.f32 %v761, 0.70710677
      %v778 = vmul.f32 %v762, 0.70710677
      %v779 = vmul.f32 %v763, 0.70710677
      %v780 = vmul.f32 %v764, 0.70710677
      %v781 = vmul.f32 %v765, 0.70710677
      %v782 = vmul.f32 %v766, 0.70710677
      %v783 = vmul.f32 %v767, 0.70710677
      %v784 = verf.f32.pop %v776
      %v785 = verf.f32.pop %v777
      %v786 = verf.f32.pop %v778
      %v787 = verf.f32.pop %v779
      %v788 = verf.f32.pop %v780
      %v789 = verf.f32.pop %v781
      %v790 = verf.f32.pop %v782
      %v791 = verf.f32.pop %v783
      %v792 = vadd.f32 %v784, 1.0
      %v793 = vadd.f32 %v785, 1.0
      %v794 = vadd.f32 %v786, 1.0
      %v795 = vadd.f32 %v787, 1.0
      %v796 = vadd.f32 %v788, 1.0
      %v797 = vadd.f32 %v789, 1.0
      %v798 = vadd.f32 %v790, 1.0
      %v799 = vadd.f32 %v791, 1.0
      %v800 = vmul.f32 %v768, %v792
      %v801 = vmul.f32 %v769, %v793
      %v802 = vmul.f32 %v770, %v794
      %v803 = vmul.f32 %v771, %v795
      %v804 = vmul.f32 %v772, %v796
      %v805 = vmul.f32 %v773, %v797
      %v806 = vmul.f32 %v774, %v798
      %v807 = vmul.f32 %v775, %v799
      %v808 = vld [vmem:[%s5] sm:$0xff]
      %v809 = vld [vmem:[%s5 + $0x8] sm:$0xff]
      %v810 = vld [vmem:[%s5 + $0x10] sm:$0xff]
      %v811 = vld [vmem:[%s5 + $0x18] sm:$0xff]
      %v812 = vld [vmem:[%s5 + $0x20] sm:$0xff]
      %v813 = vld [vmem:[%s5 + $0x28] sm:$0xff]
      %v814 = vld [vmem:[%s5 + $0x30] sm:$0xff]
      %v815 = vld [vmem:[%s5 + $0x38] sm:$0xff]
      %v816 = vld [vmem:[%s5 + $0x40] sm:$0xff]
      %v817 = vld [vmem:[%s5 + $0x48] sm:$0xff]
      %v818 = vld [vmem:[%s5 + $0x50] sm:$0xff]
      %v819 = vld [vmem:[%s5 + $0x58] sm:$0xff]
      %v820 = vld [vmem:[%s5 + $0x60] sm:$0xff]
      %v821 = vld [vmem:[%s5 + $0x68] sm:$0xff]
      %v822 = vld [vmem:[%s5 + $0x70] sm:$0xff]
      %v823 = vld [vmem:[%s5 + $0x78] sm:$0xff]
      %v824 = vld [vmem:[%s6] sm:$0x1]
      %v826 = vlaneseq
      %v827 = vshrl.u32 %v826, 7
      %v828 = vsub.s32 0, %v827
      %v829 = vrot.slane %v824, %v828
      %831 = vmatprep.subr.mxu0 0.0
      %832 = vmatpush1.msra.mxu0 %v823
      %833 = vmatprep.subr.mxu0 0.0
      %834 = vmatpush1.msra.mxu0 %v822
      %835 = vmatprep.subr.mxu0 0.0
      %836 = vmatpush1.msra.mxu0 %v821
      %837 = vmatprep.subr.mxu0 0.0
      %838 = vmatpush1.msra.mxu0 %v820
      %839 = vmatprep.subr.mxu0 0.0
      %840 = vmatpush1.msra.mxu0 %v819
      %841 = vmatprep.subr.mxu0 0.0
      %842 = vmatpush1.msra.mxu0 %v818
      %843 = vmatprep.subr.mxu0 0.0
      %844 = vmatpush1.msra.mxu0 %v817
      %845 = vmatprep.subr.mxu0 0.0
      %846 = vmatpush1.msra.mxu0 %v816
      %847 = vmatprep.subr.mxu0 0.0
      %848 = vmatpush1.msra.mxu0 %v815
      %849 = vmatprep.subr.mxu0 0.0
      %850 = vmatpush1.msra.mxu0 %v814
      %851 = vmatprep.subr.mxu0 0.0
      %852 = vmatpush1.msra.mxu0 %v813
      %853 = vmatprep.subr.mxu0 0.0
      %854 = vmatpush1.msra.mxu0 %v812
      %855 = vmatprep.subr.mxu0 0.0
      %856 = vmatpush1.msra.mxu0 %v811
      %857 = vmatprep.subr.mxu0 0.0
      %858 = vmatpush1.msra.mxu0 %v810
      %859 = vmatprep.subr.mxu0 0.0
      %860 = vmatpush1.msra.mxu0 %v809
      %861 = vmatprep.subr.mxu0 0.0
      %862 = vmatpush1.msra.mxu0 %v808
      %863 = vmatprep.subr.mxu0 0.0
      %864 = vmatpush2.msra.mxu0 0.0
      %865 = vmatprep.subr.mxu0 0.0
      %866 = vmatpush2.msra.mxu0 0.0
      %867 = vmatprep.subr.mxu0 0.0
      %868 = vmatpush2.msra.mxu0 0.0
      %869 = vmatprep.subr.mxu0 0.0
      %870 = vmatpush2.msra.mxu0 0.0
      %871 = vmatprep.subr.mxu0 0.0
      %872 = vmatpush2.msra.mxu0 0.0
      %873 = vmatprep.subr.mxu0 0.0
      %874 = vmatpush2.msra.mxu0 0.0
      %875 = vmatprep.subr.mxu0 0.0
      %876 = vmatpush2.msra.mxu0 0.0
      %877 = vmatprep.subr.mxu0 0.0
      %878 = vmatpush2.msra.mxu0 0.0
      %879 = vmatprep.subr.mxu0 0.0
      %880 = vmatpush2.msra.mxu0 0.0
      %881 = vmatprep.subr.mxu0 0.0
      %882 = vmatpush2.msra.mxu0 0.0
      %883 = vmatprep.subr.mxu0 0.0
      %884 = vmatpush2.msra.mxu0 0.0
      %885 = vmatprep.subr.mxu0 0.0
      %886 = vmatpush2.msra.mxu0 0.0
      %887 = vmatprep.subr.mxu0 0.0
      %888 = vmatpush2.msra.mxu0 0.0
      %889 = vmatprep.subr.mxu0 0.0
      %890 = vmatpush2.msra.mxu0 0.0
      %891 = vmatprep.subr.mxu0 0.0
      %892 = vmatpush2.msra.mxu0 0.0
      %893 = vmatprep.subr.mxu0 0.0
      %894 = vmatpush2.msra.mxu0 0.0
      %895 = vmatprep.mubr.f32.mxu0 0.0
      %896 = vmatmul.mubr.f32.gmra.mxu0 %v800
      %v897 = vpop.f32.mrf.mxu0
      %v898 = vadd.f32 %v829, %v897
      %v899 = vpop.f32.mrf.mxu0
      %900 = vmatprep.mubr.f32.mxu0 0.0
      %901 = vmatmul.mubr.f32.gmra.mxu0 %v801
      %v902 = vpop.f32.mrf.mxu0
      %v903 = vadd.f32 %v829, %v902
      %v904 = vpop.f32.mrf.mxu0
      %905 = vmatprep.mubr.f32.mxu0 0.0
      %906 = vmatmul.mubr.f32.gmra.mxu0 %v802
      %v907 = vpop.f32.mrf.mxu0
      %v908 = vadd.f32 %v829, %v907
      %v909 = vpop.f32.mrf.mxu0
      %910 = vmatprep.mubr.f32.mxu0 0.0
      %911 = vmatmul.mubr.f32.gmra.mxu0 %v803
      %v912 = vpop.f32.mrf.mxu0
      %v913 = vadd.f32 %v829, %v912
      %v914 = vpop.f32.mrf.mxu0
      %915 = vmatprep.mubr.f32.mxu0 0.0
      %916 = vmatmul.mubr.f32.gmra.mxu0 %v804
      %v917 = vpop.f32.mrf.mxu0
      %v918 = vadd.f32 %v829, %v917
      %v919 = vpop.f32.mrf.mxu0
      %920 = vmatprep.mubr.f32.mxu0 0.0
      %921 = vmatmul.mubr.f32.gmra.mxu0 %v805
      %v922 = vpop.f32.mrf.mxu0
      %v923 = vadd.f32 %v829, %v922
      %v924 = vpop.f32.mrf.mxu0
      %925 = vmatprep.mubr.f32.mxu0 0.0
      %926 = vmatmul.mubr.f32.gmra.mxu0 %v806
      %v927 = vpop.f32.mrf.mxu0
      %v928 = vadd.f32 %v829, %v927
      %v929 = vpop.f32.mrf.mxu0
      %930 = vmatprep.mubr.f32.mxu0 0.0
      %931 = vmatmul.mubr.f32.gmra.mxu0 %v807
      %v932 = vpop.f32.mrf.mxu0
      %v933 = vadd.f32 %v829, %v932
      %v934 = vpop.f32.mrf.mxu0
      %935 = vdwg.mxu0
      %936 = vst.msk [vmem:[%s278] sm:$0xff] %vm318, %v898
      %937 = vst.msk [vmem:[%s278 + $0x8] sm:$0xff] %vm318, %v903
      %938 = vst.msk [vmem:[%s278 + $0x10] sm:$0xff] %vm318, %v908
      %939 = vst.msk [vmem:[%s278 + $0x18] sm:$0xff] %vm318, %v913
      %940 = vst.msk [vmem:[%s278 + $0x20] sm:$0xff] %vm318, %v918
      %941 = vst.msk [vmem:[%s278 + $0x28] sm:$0xff] %vm318, %v923
      %942 = vst.msk [vmem:[%s278 + $0x30] sm:$0xff] %vm318, %v928
      %943 = vst.msk [vmem:[%s278 + $0x38] sm:$0xff] %vm318, %v933
      %p944 = scmp.lt.s32.totalorder %s18, 1
      %s945 = scalar_select %p944, %s18, 1
      %s946 = smul.addr %s945, 8
      %s947 = smul.addr %s946, 8
      %s948 = scalar_lea.vmem %s7, %s947
      // Predicated region
      $region49: #{leff_forward.1} parent=47 // pred_check
        %p949 = pneg %p188
      $region50: #{leff_forward.1} parent=47 // pred_check_branch
        %951 = sbr.rel (%p949) target = $region52
      $region51: #{leff_forward.1} parent=47 // pred_region
        _
      $region52: #{leff_forward.1} parent=47 // pred_fallthru
        _
    $region48: #{leff_forward.1} parent=5 // pred_fallthru
      _
    %p952 = scmp.le.s32.totalorder 2, %s13
    // Predicated region
    $region53: #{leff_forward.1} parent=5 // pred_check
      %p953 = pneg %p952
    $region54: #{leff_forward.1} parent=5 // pred_check_branch
      %955 = sbr.rel (%p953) target = $region56
    $region55: #{leff_forward.1} parent=5 // pred_region
      %s956 = ssub.s32 %s13, 2
      // Predicated region
      $region57: #{leff_forward.1} parent=55 // pred_check
        %p957 = pneg %p194
      $region58: #{leff_forward.1} parent=55 // pred_check_branch
        %959 = sbr.rel (%p957) target = $region60
      $region59: #{leff_forward.1} parent=55 // pred_region
        %p960 = scmp.lt.s32.totalorder %s19, 1
        %s961 = scalar_select %p960, %s19, 1
        %s962 = smul.addr %s961, 8
        %s963 = smul.addr %s962, 8
        %s964 = scalar_lea.vmem %s7, %s963
      $region60: #{leff_forward.1} parent=55 // pred_fallthru
        _
    $region56: #{leff_forward.1} parent=5 // pred_fallthru
      _
  $region6: #{leff_forward.1} parent=0 // loop_footer
    %s17 = sadd.s32 1, %s13
  $region7: #{leff_forward.1} parent=0 // loop_footer_branch
    %12 = sbr.rel target = $region3
  $region8: #{leff_forward.1} parent=0 // loop_exit
    _

</llo_original>
